<compile_context>
chip_gen: v7x
topology: tpu7x:2x2x1
jax: 0.10.0
libtpu: 0.0.40
codegen_flags: <defaults>
</compile_context>

<pallas_src>
import functools

import jax
import jax.numpy as jnp
from jax.experimental import pallas as pl
from jax.experimental.pallas import tpu as pltpu

LN_EPS = 1e-5

# ---------------------------------------------------------------------------
# Kernels
# ---------------------------------------------------------------------------


def _layer_norm_store(r, gamma, beta, o_ref):
    mean = jnp.mean(r, axis=-1, keepdims=True)          # XLU reduction
    c = r - mean
    var = jnp.mean(c * c, axis=-1, keepdims=True)
    normed = c * jax.lax.rsqrt(var + LN_EPS)             # EUP rsqrt
    o_ref[...] = (normed * gamma + beta).astype(o_ref.dtype)


def _ffn_resident_kernel(x_ref, w1_ref, b1_ref, w2_ref, b2_ref, gamma_ref,
                         beta_ref, o_ref, *, gelu_approximate):
    # Weights / biases / LN params use constant index maps -> DMA'd once,
    # VMEM-resident across all token tiles.  x_ref/o_ref: (tm, H).
    cd = w1_ref.dtype                                    # MXU compute dtype
    x = x_ref[...]

    h = jnp.dot(x.astype(cd), w1_ref[...],
                preferred_element_type=jnp.float32) + b1_ref[...]
    h = jax.nn.gelu(h, approximate=gelu_approximate)
    # TODO(synk): dropout is identity in eval mode; no stochastic mask applied.
    y = jnp.dot(h.astype(cd), w2_ref[...],
                preferred_element_type=jnp.float32) + b2_ref[...]
    r = y + x.astype(jnp.float32)                        # residual, f32
    _layer_norm_store(r, gamma_ref[...], beta_ref[...], o_ref)


def _ffn_streaming_kernel(x_ref, w1_ref, b1_ref, w2_ref, b2_ref, gamma_ref,
                          beta_ref, o_ref, acc_ref, xcd_ref, *,
                          gelu_approximate):
    # K-tiled fallback.  x_ref:(tm,H)  w1_ref:(H,ti)  b1_ref:(1,ti)
    # w2_ref:(ti,H)  b2/gamma/beta:(1,H)  acc_ref:(tm,H) f32  xcd_ref:(tm,H) cd.
    k = pl.program_id(1)

    @pl.when(k == 0)
    def _():
        acc_ref[...] = jnp.zeros_like(acc_ref)
        # Hoisted cast: x -> MXU dtype once per token tile (not once per k step).
        xcd_ref[...] = x_ref[...].astype(xcd_ref.dtype)

    h = jnp.dot(xcd_ref[...], w1_ref[...],
                preferred_element_type=jnp.float32) + b1_ref[...]
    h = jax.nn.gelu(h, approximate=gelu_approximate)
    # TODO(synk): dropout is identity in eval mode; no stochastic mask applied.
    acc_ref[...] += jnp.dot(h.astype(w2_ref.dtype), w2_ref[...],
                            preferred_element_type=jnp.float32)

    @pl.when(k == pl.num_programs(1) - 1)
    def _():
        y = acc_ref[...] + b2_ref[...]
        r = y + x_ref[...].astype(jnp.float32)
        _layer_norm_store(r, gamma_ref[...], beta_ref[...], o_ref)


# ---------------------------------------------------------------------------
# Planning helpers
# ---------------------------------------------------------------------------


def _round_up(a, b):
    return (a + b - 1) // b * b


def _cdiv(a, b):
    return -(-a // b)


def _vmem_capacity_bytes():
    try:
        cap = getattr(pltpu.get_tpu_info(), "vmem_capacity_bytes", None)
        if cap:
            return int(cap)
    except Exception:
        pass
    return 64 * 1024 * 1024  # conservative: v7x per-TensorCore VMEM


_TM_CANDIDATES = (1024, 768, 512, 384, 256, 192, 128, 96, 64, 48, 32, 16, 8)


def _resident_footprint(tm, H, I, wb, xb, ob):
    return (2 * 2 * H * I * wb            # W1 + W2 (pipeline allocates 2 bufs each)
            + 2 * tm * H * (xb + ob)      # x + out tiles, double buffered
            + 2 * tm * I * 4              # gelu / h f32 slab + cast copy headroom
            + 2 * tm * H * 4              # residual / LN f32 temporaries headroom
            + 4 * (I + 3 * H) * 4)        # biases + LN params


def _streaming_footprint(tm, ti, H, wb, xb, ob):
    return (2 * 2 * H * ti * wb           # W1 + W2 chunks, double buffered
            + 2 * tm * H * (xb + ob)      # x + out tiles, double buffered
            + tm * H * 4                  # f32 accumulator scratch
            + tm * H * wb                 # pre-cast x scratch
            + 2 * tm * ti * 4             # gelu intermediate headroom
            + 4 * (ti + 3 * H) * 4)       # biases + LN params


def _max_tm_under(footprint_fn, budget, min_sub):
    for tm in _TM_CANDIDATES:
        if tm % min_sub:
            continue
        if footprint_fn(tm) <= budget:
            return tm
    return None


def _pick_token_tile(T, min_sub, tm_cap):
    """Sublane-aligned token tile <= tm_cap minimizing (padding waste + per-step
    overhead), with a mild preference for >=2 grid steps (v7x megacore)."""
    T_al = _round_up(max(T, 1), min_sub)
    cands = {c for c in _TM_CANDIDATES if c % min_sub == 0}
    cands.add(T_al)
    if T_al >= 2 * min_sub:
        cands.add(_round_up(_cdiv(T_al, 2), min_sub))
    cands = sorted(c for c in cands if min_sub <= c <= min(tm_cap, T_al))
    if not cands:
        return min_sub

    def cost(tm):
        steps = _cdiv(T_al, tm)
        c = steps * tm + 192 * steps      # padded rows + per-step overhead (rows-eq)
        return c * (0.95 if steps >= 2 else 1.0)

    return min(cands, key=cost)


def _vmem_limit(footprint, budget):
    return int(max(min(int(1.2 * footprint), budget),
                   min(32 * 1024 * 1024, budget)))


# ---------------------------------------------------------------------------
# Wrapper
# ---------------------------------------------------------------------------


def position_wised_fnn(x2d, w1, b1, w2, b2, gamma, beta, *,
                       gelu_approximate=True, ti=None, force_streaming=False):
    """XLNet position-wise FFN forward (eval mode).

    x2d: (T, H).  w1: (H, I), w2: (I, H) are pre-transposed vs torch nn.Linear's
    (out, in) weight layout.  b1: (1, I); b2/gamma/beta: (1, H).
    gelu_approximate=True -> tanh GELU (gelu_new); set False for exact-erf parity
    with torch.nn.GELU.  Returns (T, H) in x2d.dtype.
    """
    T, H = x2d.shape
    I = w1.shape[1]
    wb = jnp.dtype(w1.dtype).itemsize
    xb = jnp.dtype(x2d.dtype).itemsize
    ob = xb

    min_sub = 8 if xb == 4 else 16            # sublane alignment for token tiles
    budget = int(0.8 * _vmem_capacity_bytes())  # ~20% headroom for compiler scratch

    # ---- plan: VMEM-resident weights when they fit, else K-tiled streaming.
    resident_cap = _max_tm_under(
        lambda tm: _resident_footprint(tm, H, I, wb, xb, ob), budget, min_sub)
    use_resident = (resident_cap is not None) and not force_streaming

    if use_resident:
        ti_eff, I_pad = I, I
        tm_eff = _pick_token_tile(T, min_sub, resident_cap)
        footprint = _resident_footprint(tm_eff, H, I, wb, xb, ob)
    else:
        ti_cands = []
        if ti is not None:
            ti_cands.append(int(ti))
        ti_cands += [t for t in (1024, 512, 256, 128) if t not in ti_cands]
        plan = None
        for t in ti_cands:
            t_eff = min(t, I)
            if t_eff < I and t_eff % 128 != 0:
                continue                       # keep chunk lane-aligned unless full
            cap = _max_tm_under(
                lambda tm: _streaming_footprint(tm, t_eff, H, wb, xb, ob),
                budget, min_sub)
            if cap is not None:
                plan = (t_eff, _round_up(I, t_eff), cap)
                break
        if plan is None:
            raise ValueError("FFN weights too large for VMEM with the smallest tiles")
        ti_eff, I_pad, stream_cap = plan
        tm_eff = _pick_token_tile(T, min_sub, stream_cap)
        footprint = _streaming_footprint(tm_eff, ti_eff, H, wb, xb, ob)

    T_pad = _round_up(max(T, min_sub), tm_eff)
    if T_pad != T:
        x2d = jnp.pad(x2d, ((0, T_pad - T), (0, 0)))
    if I_pad != I:
        # Zero-pad the intermediate dim: padded columns give gelu(0)=0 and feed
        # zero rows of W2, so the result is unchanged.
        w1 = jnp.pad(w1, ((0, 0), (0, I_pad - I)))
        b1 = jnp.pad(b1, ((0, 0), (0, I_pad - I)))
        w2 = jnp.pad(w2, ((0, I_pad - I), (0, 0)))

    vmem_limit = _vmem_limit(footprint, budget)

    if use_resident:
        kernel = functools.partial(_ffn_resident_kernel,
                                   gelu_approximate=gelu_approximate)
        out = pl.pallas_call(
            kernel,
            out_shape=jax.ShapeDtypeStruct((T_pad, H), x2d.dtype),
            grid_spec=pltpu.PrefetchScalarGridSpec(
                num_scalar_prefetch=0,
                grid=(T_pad // tm_eff,),
                in_specs=[
                    pl.BlockSpec((tm_eff, H), lambda i: (i, 0)),   # x tile
                    pl.BlockSpec((H, I_pad), lambda i: (0, 0)),    # W1 (resident)
                    pl.BlockSpec((1, I_pad), lambda i: (0, 0)),    # b1
                    pl.BlockSpec((I_pad, H), lambda i: (0, 0)),    # W2 (resident)
                    pl.BlockSpec((1, H), lambda i: (0, 0)),        # b2
                    pl.BlockSpec((1, H), lambda i: (0, 0)),        # gamma
                    pl.BlockSpec((1, H), lambda i: (0, 0)),        # beta
                ],
                out_specs=pl.BlockSpec((tm_eff, H), lambda i: (i, 0)),
            ),
            compiler_params=pltpu.CompilerParams(
                dimension_semantics=("parallel",),
                vmem_limit_bytes=vmem_limit,
            ),
        )(x2d, w1, b1, w2, b2, gamma, beta)
    else:
        kernel = functools.partial(_ffn_streaming_kernel,
                                   gelu_approximate=gelu_approximate)
        out = pl.pallas_call(
            kernel,
            out_shape=jax.ShapeDtypeStruct((T_pad, H), x2d.dtype),
            grid_spec=pltpu.PrefetchScalarGridSpec(
                num_scalar_prefetch=0,
                grid=(T_pad // tm_eff, I_pad // ti_eff),
                in_specs=[
                    pl.BlockSpec((tm_eff, H), lambda i, k: (i, 0)),    # x tile
                    pl.BlockSpec((H, ti_eff), lambda i, k: (0, k)),    # W1 chunk
                    pl.BlockSpec((1, ti_eff), lambda i, k: (0, k)),    # b1 chunk
                    pl.BlockSpec((ti_eff, H), lambda i, k: (k, 0)),    # W2 chunk
                    pl.BlockSpec((1, H), lambda i, k: (0, 0)),         # b2
                    pl.BlockSpec((1, H), lambda i, k: (0, 0)),         # gamma
                    pl.BlockSpec((1, H), lambda i, k: (0, 0)),         # beta
                ],
                out_specs=pl.BlockSpec((tm_eff, H), lambda i, k: (i, 0)),
                scratch_shapes=[
                    pltpu.VMEM((tm_eff, H), jnp.float32),   # layer-2 accumulator
                    pltpu.VMEM((tm_eff, H), w1.dtype),      # hoisted x->cd cast
                ],
            ),
            compiler_params=pltpu.CompilerParams(
                dimension_semantics=("parallel", "arbitrary"),
                vmem_limit_bytes=vmem_limit,
            ),
        )(x2d, w1, b1, w2, b2, gamma, beta)

    return out[:T]


# ---------------------------------------------------------------------------
# Demo / self-test
# ---------------------------------------------------------------------------


def _reference(x2d, w1, b1, w2, b2, gamma, beta, approximate):
    cd = w1.dtype
    h = jax.nn.gelu(
        jnp.dot(x2d.astype(cd), w1, preferred_element_type=jnp.float32) + b1,
        approximate=approximate)
    y = jnp.dot(h.astype(cd), w2, preferred_element_type=jnp.float32) + b2
    r = y + x2d.astype(jnp.float32)
    mu = r.mean(-1, keepdims=True)
    var = ((r - mu) ** 2).mean(-1, keepdims=True)
    return ((r - mu) * jax.lax.rsqrt(var + LN_EPS)) * gamma + beta


if __name__ == "__main__":
    # --- Path 1: VMEM-resident weights (the common case), tiny XLNet-like shapes.
    batch, seq, hidden, intermediate = 2, 8, 32, 64

    key = jax.random.PRNGKey(0)
    kx, k1, kb1, k2, kb2 = jax.random.split(key, 5)

    x = jax.random.normal(kx, (batch, seq, hidden), dtype=jnp.float32)
    w1 = (jax.random.normal(k1, (hidden, intermediate), jnp.float32)
          * 0.02).astype(jnp.bfloat16)
    b1 = jax.random.normal(kb1, (1, intermediate), jnp.float32) * 0.02
    w2 = (jax.random.normal(k2, (intermediate, hidden), jnp.float32)
          * 0.02).astype(jnp.bfloat16)
    b2 = jax.random.normal(kb2, (1, hidden), jnp.float32) * 0.02
    gamma = jnp.ones((1, hidden), jnp.float32)
    beta = jnp.zeros((1, hidden), jnp.float32)

    x2d = x.reshape(batch * seq, hidden)
    out2d = position_wised_fnn(x2d, w1, b1, w2, b2, gamma, beta)
    out = out2d.reshape(batch, seq, hidden)
    jax.block_until_ready(out)

    ref = _reference(x2d, w1, b1, w2, b2, gamma, beta, approximate=True)
    assert jnp.allclose(out2d, ref.astype(out2d.dtype), atol=5e-3, rtol=5e-3), \
        "resident-path mismatch vs reference"

    # --- Path 2: K-tiled streaming fallback, exercised explicitly so the
    #     accumulator / init-finalize / hoisted-cast path is validated too.
    hidden2, inter2, tok2 = 128, 256, 48
    kk = jax.random.split(jax.random.PRNGKey(1), 5)
    x2 = jax.random.normal(kk[0], (tok2, hidden2), jnp.float32)
    w1_2 = (jax.random.normal(kk[1], (hidden2, inter2), jnp.float32)
            * 0.02).astype(jnp.bfloat16)
    b1_2 = jax.random.normal(kk[2], (1, inter2), jnp.float32) * 0.02
    w2_2 = (jax.random.normal(kk[3], (inter2, hidden2), jnp.float32)
            * 0.02).astype(jnp.bfloat16)
    b2_2 = jax.random.normal(kk[4], (1, hidden2), jnp.float32) * 0.02
    gamma2 = jnp.ones((1, hidden2), jnp.float32)
    beta2 = jnp.zeros((1, hidden2), jnp.float32)

    out2 = position_wised_fnn(x2, w1_2, b1_2, w2_2, b2_2, gamma2, beta2,
                              ti=128, force_streaming=True)
    jax.block_until_ready(out2)
    ref2 = _reference(x2, w1_2, b1_2, w2_2, b2_2, gamma2, beta2, approximate=True)
    assert jnp.allclose(out2, ref2.astype(out2.dtype), atol=5e-3, rtol=5e-3), \
        "streaming-path mismatch vs reference"

    print("KERNEL_OK")
</pallas_src>

<mosaic_0001>
module attributes {stable_mosaic.version = 11 : i64} {
  func.func @_ffn_resident_kernel(%arg0: i32, %arg1: memref<16x32xf32, #tpu.memory_space<vmem>>, %arg2: memref<32x64xbf16, #tpu.memory_space<vmem>>, %arg3: memref<1x64xf32, #tpu.memory_space<vmem>>, %arg4: memref<64x32xbf16, #tpu.memory_space<vmem>>, %arg5: memref<1x32xf32, #tpu.memory_space<vmem>>, %arg6: memref<1x32xf32, #tpu.memory_space<vmem>>, %arg7: memref<1x32xf32, #tpu.memory_space<vmem>>, %arg8: memref<16x32xf32, #tpu.memory_space<vmem>>) attributes {dimension_semantics = [#tpu.dimension_semantics<parallel>], iteration_bounds = array<i64: 1>, scalar_prefetch = 0 : i64, scratch_operands = 0 : i64, tpu.core_type = #tpu.core_type<tc>, window_params = [{transform_indices = @transform_0, window_bounds = array<i64: 16, 32>}, {pipeline_mode = #tpu.pipeline_mode<synchronous>, transform_indices = @transform_1, window_bounds = array<i64: 32, 64>}, {pipeline_mode = #tpu.pipeline_mode<synchronous>, transform_indices = @transform_2, window_bounds = array<i64: 1, 64>}, {pipeline_mode = #tpu.pipeline_mode<synchronous>, transform_indices = @transform_3, window_bounds = array<i64: 64, 32>}, {pipeline_mode = #tpu.pipeline_mode<synchronous>, transform_indices = @transform_4, window_bounds = array<i64: 1, 32>}, {pipeline_mode = #tpu.pipeline_mode<synchronous>, transform_indices = @transform_5, window_bounds = array<i64: 1, 32>}, {pipeline_mode = #tpu.pipeline_mode<synchronous>, transform_indices = @transform_6, window_bounds = array<i64: 1, 32>}, {transform_indices = @transform_7, window_bounds = array<i64: 16, 32>}]} {
    %c0 = arith.constant 0 : index
    %c0_0 = arith.constant 0 : index
    %0 = vector.load %arg1[%c0, %c0_0] : memref<16x32xf32, #tpu.memory_space<vmem>>, vector<16x32xf32>
    %1 = arith.truncf %0 : vector<16x32xf32> to vector<16x32xbf16>
    %c0_1 = arith.constant 0 : index
    %c0_2 = arith.constant 0 : index
    %2 = vector.load %arg2[%c0_1, %c0_2] : memref<32x64xbf16, #tpu.memory_space<vmem>>, vector<32x64xbf16>
    %cst = arith.constant dense<0.000000e+00> : vector<16x64xf32>
    %3 = tpu.matmul %1, %2, %cst {dimension_numbers = #tpu.dot_dimension_numbers<[1], [0], [0], [1], [0, 0, 1, 1], [], []>} : vector<16x32xbf16>, vector<32x64xbf16>, vector<16x64xf32> -> vector<16x64xf32>
    %c0_3 = arith.constant 0 : index
    %c0_4 = arith.constant 0 : index
    %4 = vector.load %arg3[%c0_3, %c0_4] : memref<1x64xf32, #tpu.memory_space<vmem>>, vector<1x64xf32>
    %5 = vector.broadcast %4 : vector<1x64xf32> to vector<16x64xf32>
    %6 = arith.addf %3, %5 : vector<16x64xf32>
    %7 = arith.mulf %6, %6 : vector<16x64xf32>
    %8 = arith.mulf %6, %7 : vector<16x64xf32>
    %cst_5 = arith.constant 4.471500e-02 : f32
    %9 = vector.broadcast %cst_5 : f32 to vector<16x64xf32>
    %10 = arith.mulf %9, %8 : vector<16x64xf32>
    %11 = arith.addf %6, %10 : vector<16x64xf32>
    %cst_6 = arith.constant 0.797884583 : f32
    %12 = vector.broadcast %cst_6 : f32 to vector<16x64xf32>
    %13 = arith.mulf %12, %11 : vector<16x64xf32>
    %14 = math.tanh %13 : vector<16x64xf32>
    %cst_7 = arith.constant 1.000000e+00 : f32
    %15 = vector.broadcast %cst_7 : f32 to vector<16x64xf32>
    %16 = arith.addf %15, %14 : vector<16x64xf32>
    %cst_8 = arith.constant 5.000000e-01 : f32
    %17 = vector.broadcast %cst_8 : f32 to vector<16x64xf32>
    %18 = arith.mulf %17, %16 : vector<16x64xf32>
    %19 = arith.mulf %6, %18 : vector<16x64xf32>
    %20 = arith.truncf %19 : vector<16x64xf32> to vector<16x64xbf16>
    %c0_9 = arith.constant 0 : index
    %c0_10 = arith.constant 0 : index
    %21 = vector.load %arg4[%c0_9, %c0_10] : memref<64x32xbf16, #tpu.memory_space<vmem>>, vector<64x32xbf16>
    %cst_11 = arith.constant dense<0.000000e+00> : vector<16x32xf32>
    %22 = tpu.matmul %20, %21, %cst_11 {dimension_numbers = #tpu.dot_dimension_numbers<[1], [0], [0], [1], [0, 0, 1, 1], [], []>} : vector<16x64xbf16>, vector<64x32xbf16>, vector<16x32xf32> -> vector<16x32xf32>
    %c0_12 = arith.constant 0 : index
    %c0_13 = arith.constant 0 : index
    %23 = vector.load %arg5[%c0_12, %c0_13] : memref<1x32xf32, #tpu.memory_space<vmem>>, vector<1x32xf32>
    %24 = vector.broadcast %23 : vector<1x32xf32> to vector<16x32xf32>
    %25 = arith.addf %22, %24 : vector<16x32xf32>
    %26 = arith.addf %25, %0 : vector<16x32xf32>
    %c0_14 = arith.constant 0 : index
    %c0_15 = arith.constant 0 : index
    %27 = vector.load %arg6[%c0_14, %c0_15] : memref<1x32xf32, #tpu.memory_space<vmem>>, vector<1x32xf32>
    %c0_16 = arith.constant 0 : index
    %c0_17 = arith.constant 0 : index
    %28 = vector.load %arg7[%c0_16, %c0_17] : memref<1x32xf32, #tpu.memory_space<vmem>>, vector<1x32xf32>
    %cst_18 = arith.constant dense<0.000000e+00> : vector<16xf32>
    %29 = vector.multi_reduction <add>, %26, %cst_18 [1] : vector<16x32xf32> to vector<16xf32>
    %30 = vector.shape_cast %29 : vector<16xf32> to vector<16x1xf32>
    %cst_19 = arith.constant 3.200000e+01 : f32
    %31 = vector.broadcast %cst_19 : f32 to vector<16x1xf32>
    %32 = arith.divf %30, %31 : vector<16x1xf32>
    %33 = vector.broadcast %32 : vector<16x1xf32> to vector<16x32xf32>
    %34 = arith.subf %26, %33 : vector<16x32xf32>
    %35 = arith.mulf %34, %34 : vector<16x32xf32>
    %cst_20 = arith.constant dense<0.000000e+00> : vector<16xf32>
    %36 = vector.multi_reduction <add>, %35, %cst_20 [1] : vector<16x32xf32> to vector<16xf32>
    %37 = vector.shape_cast %36 : vector<16xf32> to vector<16x1xf32>
    %cst_21 = arith.constant 3.200000e+01 : f32
    %38 = vector.broadcast %cst_21 : f32 to vector<16x1xf32>
    %39 = arith.divf %37, %38 : vector<16x1xf32>
    %cst_22 = arith.constant 9.99999974E-6 : f32
    %40 = vector.broadcast %cst_22 : f32 to vector<16x1xf32>
    %41 = arith.addf %39, %40 : vector<16x1xf32>
    %42 = math.rsqrt %41 : vector<16x1xf32>
    %43 = vector.broadcast %42 : vector<16x1xf32> to vector<16x32xf32>
    %44 = arith.mulf %34, %43 : vector<16x32xf32>
    %45 = vector.broadcast %27 : vector<1x32xf32> to vector<16x32xf32>
    %46 = arith.mulf %44, %45 : vector<16x32xf32>
    %47 = vector.broadcast %28 : vector<1x32xf32> to vector<16x32xf32>
    %48 = arith.addf %46, %47 : vector<16x32xf32>
    %c0_23 = arith.constant 0 : index
    %c0_24 = arith.constant 0 : index
    %49 = vector.load %arg8[%c0_23, %c0_24] : memref<16x32xf32, #tpu.memory_space<vmem>>, vector<16x32xf32>
    tpu.vector_store %arg8[%c0_23, %c0_24], %48 {strides = array<i32>} : memref<16x32xf32, #tpu.memory_space<vmem>>, vector<16x32xf32>,
    return
  }
  func.func @transform_0(%arg0: i32) -> (i32, i32) {
    %c0_i32 = arith.constant 0 : i32
    %c0_i32_0 = arith.constant 0 : i32
    return %arg0, %c0_i32 : i32, i32
  }
  func.func @transform_1(%arg0: i32) -> (i32, i32) {
    %c0_i32 = arith.constant 0 : i32
    %c0_i32_0 = arith.constant 0 : i32
    %c0_i32_1 = arith.constant 0 : i32
    return %c0_i32, %c0_i32_0 : i32, i32
  }
  func.func @transform_2(%arg0: i32) -> (i32, i32) {
    %c0_i32 = arith.constant 0 : i32
    %c0_i32_0 = arith.constant 0 : i32
    %c0_i32_1 = arith.constant 0 : i32
    return %c0_i32, %c0_i32_0 : i32, i32
  }
  func.func @transform_3(%arg0: i32) -> (i32, i32) {
    %c0_i32 = arith.constant 0 : i32
    %c0_i32_0 = arith.constant 0 : i32
    %c0_i32_1 = arith.constant 0 : i32
    return %c0_i32, %c0_i32_0 : i32, i32
  }
  func.func @transform_4(%arg0: i32) -> (i32, i32) {
    %c0_i32 = arith.constant 0 : i32
    %c0_i32_0 = arith.constant 0 : i32
    %c0_i32_1 = arith.constant 0 : i32
    return %c0_i32, %c0_i32_0 : i32, i32
  }
  func.func @transform_5(%arg0: i32) -> (i32, i32) {
    %c0_i32 = arith.constant 0 : i32
    %c0_i32_0 = arith.constant 0 : i32
    %c0_i32_1 = arith.constant 0 : i32
    return %c0_i32, %c0_i32_0 : i32, i32
  }
  func.func @transform_6(%arg0: i32) -> (i32, i32) {
    %c0_i32 = arith.constant 0 : i32
    %c0_i32_0 = arith.constant 0 : i32
    %c0_i32_1 = arith.constant 0 : i32
    return %c0_i32, %c0_i32_0 : i32, i32
  }
  func.func @transform_7(%arg0: i32) -> (i32, i32) {
    %c0_i32 = arith.constant 0 : i32
    %c0_i32_0 = arith.constant 0 : i32
    return %arg0, %c0_i32 : i32, i32
  }
}

</mosaic_0001>

<llo_original>
// kernel: tpu_custom_call.1
$region0: #{tpu_custom_call.1}
  #allocation0 [shape = 'u32[]', space=smem, size = 0x4, offset = 0x4, fixed_abs, tag = 'smem constant byte address 0x4 - core index']
  #allocation1 [shape = 'u32[144,128]{1,0:T(1,128)}', space=vmem, size = 0x12000, scoped, tag = 'internal scratch']
  %s0 = inlined_call_operand.vmem [shape: f32[16,32], index: 0, kind: input, shape index: {}]
  %s1 = inlined_call_operand.vmem [shape: bf16[32,64], index: 1, kind: input, shape index: {}]
  %s2 = inlined_call_operand.vmem [shape: f32[1,64], index: 2, kind: input, shape index: {}]
  %s3 = inlined_call_operand.vmem [shape: bf16[64,32], index: 3, kind: input, shape index: {}]
  %s4 = inlined_call_operand.vmem [shape: f32[1,32], index: 4, kind: input, shape index: {}]
  %s5 = inlined_call_operand.vmem [shape: f32[1,32], index: 5, kind: input, shape index: {}]
  %s6 = inlined_call_operand.vmem [shape: f32[1,32], index: 6, kind: input, shape index: {}]
  %s7 = inlined_call_operand.hbm [shape: f32[16,32], index: 7, kind: output, shape index: {}]
  %s8 = sld [smem:[#allocation0]]
  $region38: #{tpu_custom_call.1} parent=0
    _
  %s10 = ssub.s32 1, %s8
  %s11 = scalar_select 0, %s10, %s8
  $region1: #{tpu_custom_call.1} parent=0
    #allocation2 [shape = 'u8[8192]{0}', space=vmem, size = 0x2000, scoped, tag = 'output window, operand 0, single buffered']
    #allocation3 [shape = 's32[1]{0}', space=sflag, size = 0x4, scoped, tag = 'scoped memory for tpu_custom_call.1']
    %12 = vsyncpa [#allocation3], 0
    // Predicated region
    $region2: #{tpu_custom_call.1} parent=1 // pred_check
      _
    $region3: #{tpu_custom_call.1} parent=1 // pred_check_branch
      %14 = sbr.rel (0) target = $region5
    $region4: #{tpu_custom_call.1} parent=1 // pred_region
      _
    $region5: #{tpu_custom_call.1} parent=1 // pred_fallthru
      _
    // Predicated region
    $region6: #{tpu_custom_call.1} parent=1 // pred_check
      _
    $region7: #{tpu_custom_call.1} parent=1 // pred_check_branch
      %16 = sbr.rel (0) target = $region9
    $region8: #{tpu_custom_call.1} parent=1 // pred_region
      _
    $region9: #{tpu_custom_call.1} parent=1 // pred_fallthru
      _
    // Predicated region
    $region10: #{tpu_custom_call.1} parent=1 // pred_check
      _
    $region11: #{tpu_custom_call.1} parent=1 // pred_check_branch
      %18 = sbr.rel (0) target = $region13
    $region12: #{tpu_custom_call.1} parent=1 // pred_region
      _
    $region13: #{tpu_custom_call.1} parent=1 // pred_fallthru
      _
    // Predicated region
    $region14: #{tpu_custom_call.1} parent=1 // pred_check
      _
    $region15: #{tpu_custom_call.1} parent=1 // pred_check_branch
      %20 = sbr.rel (0) target = $region17
    $region16: #{tpu_custom_call.1} parent=1 // pred_region
      _
    $region17: #{tpu_custom_call.1} parent=1 // pred_fallthru
      _
    // Predicated region
    $region18: #{tpu_custom_call.1} parent=1 // pred_check
      _
    $region19: #{tpu_custom_call.1} parent=1 // pred_check_branch
      %22 = sbr.rel (0) target = $region21
    $region20: #{tpu_custom_call.1} parent=1 // pred_region
      _
    $region21: #{tpu_custom_call.1} parent=1 // pred_fallthru
      _
    // Predicated region
    $region22: #{tpu_custom_call.1} parent=1 // pred_check
      _
    $region23: #{tpu_custom_call.1} parent=1 // pred_check_branch
      %24 = sbr.rel (0) target = $region25
    $region24: #{tpu_custom_call.1} parent=1 // pred_region
      _
    $region25: #{tpu_custom_call.1} parent=1 // pred_fallthru
      _
    // Predicated region
    $region26: #{tpu_custom_call.1} parent=1 // pred_check
      _
    $region27: #{tpu_custom_call.1} parent=1 // pred_check_branch
      %26 = sbr.rel (0) target = $region29
    $region28: #{tpu_custom_call.1} parent=1 // pred_region
      _
    $region29: #{tpu_custom_call.1} parent=1 // pred_fallthru
      _
    %v28 = vld [vmem:[%s0] sm:$0xff]
    %v29 = vld [vmem:[%s0 + $0x8] sm:$0xff]
    %v30 = vpack.c.bf16 %v29, %v28
    %v31 = vld [vmem:[%s1] sm:$0xf]
    %v32 = vld [vmem:[%s1 + $0x4] sm:$0xf]
    %v33 = vld [vmem:[%s1 + $0x8] sm:$0xf]
    %v34 = vld [vmem:[%s1 + $0xc] sm:$0xf]
    %v35 = vld [vmem:[%s2] sm:$0x1]
    %v37 = vlaneseq
    %v38 = vshrl.u32 %v37, 7
    %v39 = vsub.s32 0, %v38
    %v40 = vrot.slane %v35, %v39
    %v46 = vunpack.c.l.b16 %v31
    %v47 = vunpack.c.l.b16 %v32
    %v48 = vunpack.c.l.b16 %v33
    %v49 = vunpack.c.l.b16 %v34
    %v50 = vpack.c.b16 %v47, %v46
    %v51 = vpack.c.b16 %v49, %v48
    %vm54 = vcmask 261120
    %v56 = vsel %vm54, %v30, 0
    %58 = vmatprep.subr.bf16.mxu0 0
    %59 = vmatpush1.bf16.msra.mxu0 %v50
    %60 = vmatprep.subr.bf16.mxu0 0
    %61 = vmatpush1.bf16.msra.mxu0 %v51
    %62 = vmatprep.subr.bf16.mxu0 0
    %63 = vmatpush1.bf16.msra.mxu0 0
    %64 = vmatprep.subr.bf16.mxu0 0
    %65 = vmatpush1.bf16.msra.mxu0 0
    %66 = vmatprep.subr.bf16.mxu0 0
    %67 = vmatpush1.bf16.msra.mxu0 0
    %68 = vmatprep.subr.bf16.mxu0 0
    %69 = vmatpush1.bf16.msra.mxu0 0
    %70 = vmatprep.subr.bf16.mxu0 0
    %71 = vmatpush1.bf16.msra.mxu0 0
    %72 = vmatprep.subr.bf16.mxu0 0
    %73 = vmatpush1.bf16.msra.mxu0 0
    %74 = vmatprep.subr.bf16.mxu0 0
    %75 = vmatpush1.bf16.msra.mxu0 0
    %76 = vmatprep.subr.bf16.mxu0 0
    %77 = vmatpush1.bf16.msra.mxu0 0
    %78 = vmatprep.subr.bf16.mxu0 0
    %79 = vmatpush1.bf16.msra.mxu0 0
    %80 = vmatprep.subr.bf16.mxu0 0
    %81 = vmatpush1.bf16.msra.mxu0 0
    %82 = vmatprep.subr.bf16.mxu0 0
    %83 = vmatpush1.bf16.msra.mxu0 0
    %84 = vmatprep.subr.bf16.mxu0 0
    %85 = vmatpush1.bf16.msra.mxu0 0
    %86 = vmatprep.subr.bf16.mxu0 0
    %87 = vmatpush1.bf16.msra.mxu0 0
    %88 = vmatprep.subr.bf16.mxu0 0
    %89 = vmatpush1.bf16.msra.mxu0 0
    %90 = vmatprep.mubr.bf16.mxu0 0
    %91 = vmatmul.mubr.bf16.gmra.mrb[0].mxu0 %v56
    %v92 = vpop.f32.mrb[0].mxu0
    %v93 = vadd.f32 %v40, %v92
    %v94 = vpop.f32.mrb[0].mxu0
    %v95 = vpop.f32.mrb[0].mxu0
    %v96 = vadd.f32 %v40, %v95
    %v97 = vpop.f32.mrb[0].mxu0
    %98 = vdwg.mxu0
    %v99 = vmul.f32 %v93, %v93
    %v100 = vmul.f32 %v96, %v96
    %v101 = vmul.f32 %v93, %v99
    %v102 = vmul.f32 %v96, %v100
    %v103 = vmul.f32 %v101, 0.044715
    %v104 = vmul.f32 %v102, 0.044715
    %v105 = vadd.f32 %v93, %v103
    %v106 = vadd.f32 %v96, %v104
    %v107 = vmul.f32 %v105, 0.7978846
    %v108 = vmul.f32 %v106, 0.7978846
    %v109 = vtanh.pop %v107
    %v110 = vtanh.pop %v108
    %v111 = vadd.f32 %v109, 1.0
    %v112 = vadd.f32 %v110, 1.0
    %v113 = vmul.f32 %v111, 0.5
    %v114 = vmul.f32 %v112, 0.5
    %v115 = vmul.f32 %v93, %v113
    %v116 = vmul.f32 %v96, %v114
    %v117 = vpack.c.bf16 %v116, %v115
    %v118 = vld [vmem:[%s3] sm:$0xf]
    %v119 = vld [vmem:[%s3 + $0x4] sm:$0xf]
    %v120 = vld [vmem:[%s3 + $0x8] sm:$0xf]
    %v121 = vld [vmem:[%s3 + $0xc] sm:$0xf]
    %v122 = vld [vmem:[%s3 + $0x10] sm:$0xf]
    %v123 = vld [vmem:[%s3 + $0x14] sm:$0xf]
    %v124 = vld [vmem:[%s3 + $0x18] sm:$0xf]
    %v125 = vld [vmem:[%s3 + $0x1c] sm:$0xf]
    %v126 = vld [vmem:[%s4] sm:$0x1]
    %v128 = vlaneseq
    %v129 = vshrl.u32 %v128, 7
    %v130 = vsub.s32 0, %v129
    %v131 = vrot.slane %v126, %v130
    %v141 = vunpack.c.l.b16 %v118
    %v142 = vunpack.c.l.b16 %v119
    %v143 = vunpack.c.l.b16 %v120
    %v144 = vunpack.c.l.b16 %v121
    %v145 = vunpack.c.l.b16 %v122
    %v146 = vunpack.c.l.b16 %v123
    %v147 = vunpack.c.l.b16 %v124
    %v148 = vunpack.c.l.b16 %v125
    %v149 = vpack.c.b16 %v142, %v141
    %v150 = vpack.c.b16 %v144, %v143
    %v151 = vpack.c.b16 %v146, %v145
    %v152 = vpack.c.b16 %v148, %v147
    %vm157 = vcmask 523264
    %v159 = vsel %vm157, %v117, 0
    %161 = vmatprep.subr.bf16.mxu0 0
    %162 = vmatpush1.bf16.msra.mxu0 %v149
    %163 = vmatprep.subr.bf16.mxu0 0
    %164 = vmatpush1.bf16.msra.mxu0 %v150
    %165 = vmatprep.subr.bf16.mxu0 0
    %166 = vmatpush1.bf16.msra.mxu0 %v151
    %167 = vmatprep.subr.bf16.mxu0 0
    %168 = vmatpush1.bf16.msra.mxu0 %v152
    %169 = vmatprep.subr.bf16.mxu0 0
    %170 = vmatpush1.bf16.msra.mxu0 0
    %171 = vmatprep.subr.bf16.mxu0 0
    %172 = vmatpush1.bf16.msra.mxu0 0
    %173 = vmatprep.subr.bf16.mxu0 0
    %174 = vmatpush1.bf16.msra.mxu0 0
    %175 = vmatprep.subr.bf16.mxu0 0
    %176 = vmatpush1.bf16.msra.mxu0 0
    %177 = vmatprep.subr.bf16.mxu0 0
    %178 = vmatpush1.bf16.msra.mxu0 0
    %179 = vmatprep.subr.bf16.mxu0 0
    %180 = vmatpush1.bf16.msra.mxu0 0
    %181 = vmatprep.subr.bf16.mxu0 0
    %182 = vmatpush1.bf16.msra.mxu0 0
    %183 = vmatprep.subr.bf16.mxu0 0
    %184 = vmatpush1.bf16.msra.mxu0 0
    %185 = vmatprep.subr.bf16.mxu0 0
    %186 = vmatpush1.bf16.msra.mxu0 0
    %187 = vmatprep.subr.bf16.mxu0 0
    %188 = vmatpush1.bf16.msra.mxu0 0
    %189 = vmatprep.subr.bf16.mxu0 0
    %190 = vmatpush1.bf16.msra.mxu0 0
    %191 = vmatprep.subr.bf16.mxu0 0
    %192 = vmatpush1.bf16.msra.mxu0 0
    %193 = vmatprep.mubr.bf16.mxu0 0
    %194 = vmatmul.mubr.bf16.gmra.mrb[0].mxu0 %v159
    %v195 = vpop.f32.mrb[0].mxu0
    %v196 = vadd.f32 %v131, %v195
    %v197 = vpop.f32.mrb[0].mxu0
    %v198 = vpop.f32.mrb[0].mxu0
    %v199 = vadd.f32 %v131, %v198
    %v200 = vpop.f32.mrb[0].mxu0
    %201 = vdwg.mxu0
    %v202 = vadd.f32 %v196, %v28
    %v203 = vadd.f32 %v199, %v29
    %v204 = vld [vmem:[%s5] sm:$0x1]
    %v205 = vld [vmem:[%s6] sm:$0x1]
    %v206 = vsel %vm54, %v202, 0.0
    %207 = vadd.xlane.f32.xlu0 %v206
    %v208 = vpop.xlane.xlu0 %207
    %v209 = vsel %vm54, %v203, 0.0
    %210 = vadd.xlane.f32.xlu0 %v209
    %v211 = vpop.xlane.xlu0 %210
    %v212 = vrcp.pop 32.0
    %v213 = vmul.f32 %v208, %v212
    %v214 = vmul.f32 %v211, %v212
    %v215 = vsub.f32 %v202, %v213
    %v216 = vsub.f32 %v203, %v214
    %v217 = vmul.f32 %v215, %v215
    %v218 = vmul.f32 %v216, %v216
    %v219 = vsel %vm54, %v217, 0.0
    %220 = vadd.xlane.f32.xlu0 %v219
    %v221 = vpop.xlane.xlu0 %220
    %v222 = vsel %vm54, %v218, 0.0
    %223 = vadd.xlane.f32.xlu0 %v222
    %v224 = vpop.xlane.xlu0 %223
    %v225 = vmul.f32 %v221, %v212
    %v226 = vmul.f32 %v224, %v212
    %v227 = vadd.f32 %v225, 1e-05
    %v228 = vadd.f32 %v226, 1e-05
    %v229 = vrsqrt.pop %v227
    %v230 = vrsqrt.pop %v228
    %v231 = vmul.f32 %v215, %v229
    %v232 = vmul.f32 %v216, %v230
    %v234 = vlaneseq
    %v235 = vshrl.u32 %v234, 7
    %v236 = vsub.s32 0, %v235
    %v237 = vrot.slane %v204, %v236
    %v239 = vmul.f32 %v231, %v237
    %v240 = vmul.f32 %v232, %v237
    %v242 = vlaneseq
    %v243 = vshrl.u32 %v242, 7
    %v244 = vsub.s32 0, %v243
    %v245 = vrot.slane %v205, %v244
    %v247 = vadd.f32 %v239, %v245
    %v248 = vadd.f32 %v240, %v245
    %249 = vst.msk [vmem:[#allocation2] sm:$0xff] %vm54, %v247
    %250 = vst.msk [vmem:[#allocation2 + $0x8] sm:$0xff] %vm54, %v248
    // Predicated region
    $region30: #{tpu_custom_call.1} parent=1 // pred_check
      _
    $region31: #{tpu_custom_call.1} parent=1 // pred_check_branch
      %252 = sbr.rel (0) target = $region33
    $region32: #{tpu_custom_call.1} parent=1 // pred_region
      %s254 = ssub.s32 256, 256
      %255 = vsyncadd [#allocation3], %s254
      %s256 = sshll.u32 [#allocation2], 4
      %s257 = int_to_ptr.vmem [resolvable:$true] %s256
      %262 = dma.vmem_to_hbm [thread:$0]  %s257, 256, %s7, [#allocation3], 128, 128, 8
    $region33: #{tpu_custom_call.1} parent=1 // pred_fallthru
      _
    // Predicated region
    $region34: #{tpu_custom_call.1} parent=1 // pred_check
      _
    $region35: #{tpu_custom_call.1} parent=1 // pred_check_branch
      %264 = sbr.rel (0) target = $region37
    $region36: #{tpu_custom_call.1} parent=1 // pred_region
      %265 = dma.done [#allocation3], 256
    $region37: #{tpu_custom_call.1} parent=1 // pred_fallthru
      _
    %266 = vsyncpa [#allocation3], 1

</llo_original>
